<compile_context>
chip_gen: v6e
topology: v6e:2x2x1
jax: 0.10.0
libtpu: 0.0.40
codegen_flags: <defaults>
</compile_context>

<pallas_src>
import functools

import jax
import jax.numpy as jnp
from jax.experimental import pallas as pl
from jax.experimental.pallas import tpu as pltpu

LANE = 128
SUBLANE = 8


def _round_up(x, m):
    return (x + m - 1) // m * m


def _vmem_limit_bytes():
    """Derive a per-generation VMEM budget with headroom (fallback: 32 MiB)."""
    try:
        return int(pltpu.get_tpu_info().vmem_capacity_bytes) * 3 // 4
    except Exception:
        return 32 << 20


def _pick_row_tile(n_pad, n_cols_bytes, budget):
    """Largest row tile dividing n_pad whose double-buffered A tile fits budget/4."""
    for tm in (1024, 512, 256, 128, 64, 32, 16, 8):
        if n_pad % tm == 0 and 2 * tm * n_cols_bytes <= max(budget // 4, 1 << 20):
            return tm
    return SUBLANE if n_pad % SUBLANE == 0 else n_pad


def _sage_layer_kernel(a_ref, xfull_ref, xrow_ref, wl_ref, wr_ref, b_ref, o_ref,
                       *, apply_relu):
    # a_ref:     (tm, N)     bf16 row-tile of the mean-aggregation matrix
    # xfull_ref: (N, Cin)    bf16 features, resident across the grid
    # xrow_ref:  (tm, Cin)   bf16 row-tile of features (self / root term)
    # wl/wr:     (Cin, Cout) bf16 weights;  b: (1, Cout) f32 bias
    agg = jnp.dot(a_ref[...], xfull_ref[...],
                  preferred_element_type=jnp.float32)             # (tm, Cin) f32
    out = (jnp.dot(agg.astype(jnp.bfloat16), wl_ref[...],
                   preferred_element_type=jnp.float32)
           + jnp.dot(xrow_ref[...], wr_ref[...],
                     preferred_element_type=jnp.float32)
           + b_ref[...])                                          # (tm, Cout) f32
    if apply_relu:
        out = jnp.maximum(out, 0.0)
    o_ref[...] = out.astype(o_ref.dtype)


def _sage_layer(a, x, wl, wr, b, *, apply_relu, out_dtype, tm, vmem_limit):
    n_pad = a.shape[0]
    cin = x.shape[1]
    cout = wl.shape[1]
    return pl.pallas_call(
        functools.partial(_sage_layer_kernel, apply_relu=apply_relu),
        out_shape=jax.ShapeDtypeStruct((n_pad, cout), out_dtype),
        grid=(n_pad // tm,),
        in_specs=[
            pl.BlockSpec((tm, n_pad), lambda i: (i, 0)),    # A row tile
            pl.BlockSpec((n_pad, cin), lambda i: (0, 0)),   # X (resident)
            pl.BlockSpec((tm, cin), lambda i: (i, 0)),      # X row tile (self term)
            pl.BlockSpec((cin, cout), lambda i: (0, 0)),    # W_l
            pl.BlockSpec((cin, cout), lambda i: (0, 0)),    # W_r
            pl.BlockSpec((1, cout), lambda i: (0, 0)),      # bias
        ],
        out_specs=pl.BlockSpec((tm, cout), lambda i: (i, 0)),
        compiler_params=pltpu.CompilerParams(
            dimension_semantics=("parallel",),
            vmem_limit_bytes=vmem_limit,
        ),
        # x is passed twice: once as the resident full feature matrix, once as
        # the per-grid-step row tile.  6 arrays <-> 6 in_specs.
    )(a, x, x, wl, wr, b)


def build_mean_agg_matrix(edge_index, num_nodes_padded):
    """Dense row-normalized aggregation matrix (bf16), padded rows/cols are zero."""
    src, dst = edge_index[0], edge_index[1]
    adj = jnp.zeros((num_nodes_padded, num_nodes_padded),
                    jnp.float32).at[dst, src].add(1.0)
    deg = adj.sum(axis=1, keepdims=True)
    return (adj / jnp.maximum(deg, 1.0)).astype(jnp.bfloat16)


def _pad2(arr, rows, cols, dtype):
    out = jnp.zeros((rows, cols), dtype)
    return out.at[:arr.shape[0], :arr.shape[1]].set(arr.astype(dtype))


def graphsage_forward(x, edge_index, params):
    n, cin = x.shape
    hidden = params["wl1"].shape[1]
    cout = params["wl2"].shape[1]

    n_pad = _round_up(n, SUBLANE)
    cin_p = _round_up(cin, LANE)
    hid_p = _round_up(hidden, LANE)
    cout_p = _round_up(cout, LANE)

    vmem_limit = _vmem_limit_bytes()
    tm = _pick_row_tile(n_pad, n_pad * 2, vmem_limit)   # A tile is bf16 (2 B/elem)

    a = build_mean_agg_matrix(edge_index, n_pad)

    xp = _pad2(x, n_pad, cin_p, jnp.bfloat16)
    wl1 = _pad2(params["wl1"], cin_p, hid_p, jnp.bfloat16)
    wr1 = _pad2(params["wr1"], cin_p, hid_p, jnp.bfloat16)
    b1 = _pad2(params["b1"], 1, hid_p, jnp.float32)
    wl2 = _pad2(params["wl2"], hid_p, cout_p, jnp.bfloat16)
    wr2 = _pad2(params["wr2"], hid_p, cout_p, jnp.bfloat16)
    b2 = _pad2(params["b2"], 1, cout_p, jnp.float32)

    # layer 1 (+ fused ReLU); output kept bf16 since it feeds layer-2 MXU matmuls
    h = _sage_layer(a, xp, wl1, wr1, b1, apply_relu=True,
                    out_dtype=jnp.bfloat16, tm=tm, vmem_limit=vmem_limit)
    # layer 2; f32 output
    out = _sage_layer(a, h, wl2, wr2, b2, apply_relu=False,
                      out_dtype=jnp.float32, tm=tm, vmem_limit=vmem_limit)
    return out[:n, :cout]


def reference_forward(x, edge_index, params):
    """Pure-JAX f32 reference of the same math."""
    n = x.shape[0]
    src, dst = edge_index[0], edge_index[1]
    adj = jnp.zeros((n, n), jnp.float32).at[dst, src].add(1.0)
    a = adj / jnp.maximum(adj.sum(axis=1, keepdims=True), 1.0)
    h = a @ x @ params["wl1"] + x @ params["wr1"] + params["b1"]
    h = jnp.maximum(h, 0.0)
    return a @ h @ params["wl2"] + h @ params["wr2"] + params["b2"]


def init_params(key, in_channels, hidden_channels, out_channels):
    ks = jax.random.split(key, 6)
    s1 = 1.0 / jnp.sqrt(in_channels)
    s2 = 1.0 / jnp.sqrt(hidden_channels)
    return {
        "wl1": jax.random.uniform(ks[0], (in_channels, hidden_channels), jnp.float32, -s1, s1),
        "wr1": jax.random.uniform(ks[1], (in_channels, hidden_channels), jnp.float32, -s1, s1),
        "b1":  jax.random.uniform(ks[2], (1, hidden_channels), jnp.float32, -s1, s1),
        "wl2": jax.random.uniform(ks[3], (hidden_channels, out_channels), jnp.float32, -s2, s2),
        "wr2": jax.random.uniform(ks[4], (hidden_channels, out_channels), jnp.float32, -s2, s2),
        "b2":  jax.random.uniform(ks[5], (1, out_channels), jnp.float32, -s2, s2),
    }


if __name__ == "__main__":
    key = jax.random.PRNGKey(0)
    k_x, k_p = jax.random.split(key)

    num_nodes = 16
    in_channels, hidden_channels, out_channels = 4, 32, 8

    # node features
    x = jax.random.normal(k_x, (num_nodes, in_channels), jnp.float32)

    # deterministic small graph: directed ring + a few chords, shape (2, E)
    src = jnp.array([i for i in range(num_nodes)] + [0, 3, 7, 11], dtype=jnp.int32)
    dst = jnp.array([(i + 1) % num_nodes for i in range(num_nodes)] + [8, 12, 2, 5],
                    dtype=jnp.int32)
    edge_index = jnp.stack([src, dst], axis=0)

    params = init_params(k_p, in_channels, hidden_channels, out_channels)

    out = graphsage_forward(x, edge_index, params)
    jax.block_until_ready(out)

    ref = reference_forward(x, edge_index, params)
    assert out.shape == (num_nodes, out_channels)
    # bf16 MXU inputs with f32 accumulation -> ~1e-3..1e-2 relative error budget
    assert jnp.allclose(out, ref, atol=5e-2, rtol=5e-2), float(jnp.max(jnp.abs(out - ref)))

    print("KERNEL_OK")
</pallas_src>

<mosaic_0001>
module attributes {stable_mosaic.version = 11 : i64} {
  func.func @_sage_layer_kernel(%arg0: i32, %arg1: memref<16x16xbf16, #tpu.memory_space<vmem>>, %arg2: memref<16x128xbf16, #tpu.memory_space<vmem>>, %arg3: memref<16x128xbf16, #tpu.memory_space<vmem>>, %arg4: memref<128x128xbf16, #tpu.memory_space<vmem>>, %arg5: memref<128x128xbf16, #tpu.memory_space<vmem>>, %arg6: memref<1x128xf32, #tpu.memory_space<vmem>>, %arg7: memref<16x128xbf16, #tpu.memory_space<vmem>>) attributes {dimension_semantics = [#tpu.dimension_semantics<parallel>], iteration_bounds = array<i64: 1>, scalar_prefetch = 0 : i64, scratch_operands = 0 : i64, tpu.core_type = #tpu.core_type<tc>, window_params = [{transform_indices = @transform_0, window_bounds = array<i64: 16, 16>}, {pipeline_mode = #tpu.pipeline_mode<synchronous>, transform_indices = @transform_1, window_bounds = array<i64: 16, 128>}, {transform_indices = @transform_2, window_bounds = array<i64: 16, 128>}, {pipeline_mode = #tpu.pipeline_mode<synchronous>, transform_indices = @transform_3, window_bounds = array<i64: 128, 128>}, {pipeline_mode = #tpu.pipeline_mode<synchronous>, transform_indices = @transform_4, window_bounds = array<i64: 128, 128>}, {pipeline_mode = #tpu.pipeline_mode<synchronous>, transform_indices = @transform_5, window_bounds = array<i64: 1, 128>}, {transform_indices = @transform_6, window_bounds = array<i64: 16, 128>}]} {
    %c0 = arith.constant 0 : index
    %c0_0 = arith.constant 0 : index
    %0 = vector.load %arg1[%c0, %c0_0] : memref<16x16xbf16, #tpu.memory_space<vmem>>, vector<16x16xbf16>
    %c0_1 = arith.constant 0 : index
    %c0_2 = arith.constant 0 : index
    %1 = vector.load %arg2[%c0_1, %c0_2] : memref<16x128xbf16, #tpu.memory_space<vmem>>, vector<16x128xbf16>
    %cst = arith.constant dense<0.000000e+00> : vector<16x128xf32>
    %2 = tpu.matmul %0, %1, %cst {dimension_numbers = #tpu.dot_dimension_numbers<[1], [0], [0], [1], [0, 0, 1, 1], [], []>} : vector<16x16xbf16>, vector<16x128xbf16>, vector<16x128xf32> -> vector<16x128xf32>
    %3 = arith.truncf %2 : vector<16x128xf32> to vector<16x128xbf16>
    %c0_3 = arith.constant 0 : index
    %c0_4 = arith.constant 0 : index
    %4 = vector.load %arg4[%c0_3, %c0_4] : memref<128x128xbf16, #tpu.memory_space<vmem>>, vector<128x128xbf16>
    %cst_5 = arith.constant dense<0.000000e+00> : vector<16x128xf32>
    %5 = tpu.matmul %3, %4, %cst_5 {dimension_numbers = #tpu.dot_dimension_numbers<[1], [0], [0], [1], [0, 0, 1, 1], [], []>} : vector<16x128xbf16>, vector<128x128xbf16>, vector<16x128xf32> -> vector<16x128xf32>
    %c0_6 = arith.constant 0 : index
    %c0_7 = arith.constant 0 : index
    %6 = vector.load %arg3[%c0_6, %c0_7] : memref<16x128xbf16, #tpu.memory_space<vmem>>, vector<16x128xbf16>
    %c0_8 = arith.constant 0 : index
    %c0_9 = arith.constant 0 : index
    %7 = vector.load %arg5[%c0_8, %c0_9] : memref<128x128xbf16, #tpu.memory_space<vmem>>, vector<128x128xbf16>
    %cst_10 = arith.constant dense<0.000000e+00> : vector<16x128xf32>
    %8 = tpu.matmul %6, %7, %cst_10 {dimension_numbers = #tpu.dot_dimension_numbers<[1], [0], [0], [1], [0, 0, 1, 1], [], []>} : vector<16x128xbf16>, vector<128x128xbf16>, vector<16x128xf32> -> vector<16x128xf32>
    %9 = arith.addf %5, %8 : vector<16x128xf32>
    %c0_11 = arith.constant 0 : index
    %c0_12 = arith.constant 0 : index
    %10 = vector.load %arg6[%c0_11, %c0_12] : memref<1x128xf32, #tpu.memory_space<vmem>>, vector<1x128xf32>
    %11 = vector.broadcast %10 : vector<1x128xf32> to vector<16x128xf32>
    %12 = arith.addf %9, %11 : vector<16x128xf32>
    %cst_13 = arith.constant 0.000000e+00 : f32
    %13 = vector.broadcast %cst_13 : f32 to vector<16x128xf32>
    %14 = arith.maximumf %12, %13 : vector<16x128xf32>
    %15 = arith.truncf %14 : vector<16x128xf32> to vector<16x128xbf16>
    %c0_14 = arith.constant 0 : index
    %c0_15 = arith.constant 0 : index
    %16 = vector.load %arg7[%c0_14, %c0_15] : memref<16x128xbf16, #tpu.memory_space<vmem>>, vector<16x128xbf16>
    tpu.vector_store %arg7[%c0_14, %c0_15], %15 {strides = array<i32>} : memref<16x128xbf16, #tpu.memory_space<vmem>>, vector<16x128xbf16>,
    return
  }
  func.func @transform_0(%arg0: i32) -> (i32, i32) {
    %c0_i32 = arith.constant 0 : i32
    %c0_i32_0 = arith.constant 0 : i32
    return %arg0, %c0_i32 : i32, i32
  }
  func.func @transform_1(%arg0: i32) -> (i32, i32) {
    %c0_i32 = arith.constant 0 : i32
    %c0_i32_0 = arith.constant 0 : i32
    %c0_i32_1 = arith.constant 0 : i32
    return %c0_i32, %c0_i32_0 : i32, i32
  }
  func.func @transform_2(%arg0: i32) -> (i32, i32) {
    %c0_i32 = arith.constant 0 : i32
    %c0_i32_0 = arith.constant 0 : i32
    return %arg0, %c0_i32 : i32, i32
  }
  func.func @transform_3(%arg0: i32) -> (i32, i32) {
    %c0_i32 = arith.constant 0 : i32
    %c0_i32_0 = arith.constant 0 : i32
    %c0_i32_1 = arith.constant 0 : i32
    return %c0_i32, %c0_i32_0 : i32, i32
  }
  func.func @transform_4(%arg0: i32) -> (i32, i32) {
    %c0_i32 = arith.constant 0 : i32
    %c0_i32_0 = arith.constant 0 : i32
    %c0_i32_1 = arith.constant 0 : i32
    return %c0_i32, %c0_i32_0 : i32, i32
  }
  func.func @transform_5(%arg0: i32) -> (i32, i32) {
    %c0_i32 = arith.constant 0 : i32
    %c0_i32_0 = arith.constant 0 : i32
    %c0_i32_1 = arith.constant 0 : i32
    return %c0_i32, %c0_i32_0 : i32, i32
  }
  func.func @transform_6(%arg0: i32) -> (i32, i32) {
    %c0_i32 = arith.constant 0 : i32
    %c0_i32_0 = arith.constant 0 : i32
    return %arg0, %c0_i32 : i32, i32
  }
}

</mosaic_0001>

<llo_original>
// kernel: tpu_custom_call.1
$region0: #{tpu_custom_call.1}
  #allocation0 [shape = 'u32[]', space=smem, size = 0x4, offset = 0x4, fixed_abs, tag = 'smem constant byte address 0x4 - core index']
  #allocation1 [shape = 'u32[144,128]{1,0:T(1,128)}', space=vmem, size = 0x12000, scoped, tag = 'internal scratch']
  %s0 = inlined_call_operand.hbm [shape: bf16[16,16], index: 0, kind: input, shape index: {}]
  %s1 = inlined_call_operand.hbm [shape: bf16[16,128], index: 1, kind: input, shape index: {}]
  %s2 = inlined_call_operand.hbm [shape: bf16[16,128], index: 2, kind: input, shape index: {}]
  %s3 = inlined_call_operand.hbm [shape: bf16[128,128], index: 3, kind: input, shape index: {}]
  %s4 = inlined_call_operand.hbm [shape: bf16[128,128], index: 4, kind: input, shape index: {}]
  %s5 = inlined_call_operand.vmem [shape: f32[1,128], index: 5, kind: input, shape index: {}]
  %s6 = inlined_call_operand.hbm [shape: bf16[16,128], index: 6, kind: output, shape index: {}]
  %s7 = sld [smem:[#allocation0]]
  $region54: #{tpu_custom_call.1} parent=0
    _
  %s9 = ssub.s32 1, %s7
  %s10 = scalar_select 0, %s9, %s7
  $region1: #{tpu_custom_call.1} parent=0
    #allocation2 [shape = 'u8[4096]{0}', space=vmem, size = 0x1000, scoped, tag = 'input window, operand 0, single buffered']
    #allocation3 [shape = 's32[1]{0}', space=sflag, size = 0x4, scoped, tag = 'scoped memory for tpu_custom_call.1']
    #allocation4 [shape = 's32[1]{0}', space=sflag, size = 0x4, scoped, tag = 'scoped memory for tpu_custom_call.1']
    #allocation5 [shape = 'u8[4096]{0}', space=vmem, size = 0x1000, scoped, tag = 'input window, operand 1, single buffered']
    #allocation6 [shape = 's32[1]{0}', space=sflag, size = 0x4, scoped, tag = 'scoped memory for tpu_custom_call.1']
    #allocation7 [shape = 'u8[4096]{0}', space=vmem, size = 0x1000, scoped, tag = 'input window, operand 2, single buffered']
    #allocation8 [shape = 'u8[32768]{0}', space=vmem, size = 0x8000, scoped, tag = 'input window, operand 3, single buffered']
    #allocation9 [shape = 's32[1]{0}', space=sflag, size = 0x4, scoped, tag = 'scoped memory for tpu_custom_call.1']
    #allocation10 [shape = 'u8[32768]{0}', space=vmem, size = 0x8000, scoped, tag = 'input window, operand 4, single buffered']
    #allocation11 [shape = 'u8[4096]{0}', space=vmem, size = 0x1000, scoped, tag = 'output window, operand 0, single buffered']
    %11 = vsyncpa [#allocation3], 0
    %12 = vsyncpa [#allocation6], 0
    %13 = vsyncpa [#allocation9], 0
    %14 = vsyncpa [#allocation4], 0
    // Predicated region
    $region2: #{tpu_custom_call.1} parent=1 // pred_check
      _
    $region3: #{tpu_custom_call.1} parent=1 // pred_check_branch
      %16 = sbr.rel (0) target = $region5
    $region4: #{tpu_custom_call.1} parent=1 // pred_region
      %s18 = ssub.s32 128, 128
      %19 = vsyncadd [#allocation3], %s18
      %s20 = sshll.u32 [#allocation2], 4
      %s21 = int_to_ptr.vmem [resolvable:$true] %s20
      %26 = dma.hbm_to_vmem [thread:$0]  %s0, 128, %s21, [#allocation3], 64, 64, 4
    $region5: #{tpu_custom_call.1} parent=1 // pred_fallthru
      _
    // Predicated region
    $region6: #{tpu_custom_call.1} parent=1 // pred_check
      _
    $region7: #{tpu_custom_call.1} parent=1 // pred_check_branch
      %28 = sbr.rel (0) target = $region9
    $region8: #{tpu_custom_call.1} parent=1 // pred_region
      %s30 = ssub.s32 128, 128
      %31 = vsyncadd [#allocation6], %s30
      %s32 = sshll.u32 [#allocation5], 4
      %s33 = int_to_ptr.vmem [resolvable:$true] %s32
      %38 = dma.hbm_to_vmem [thread:$0]  %s1, 128, %s33, [#allocation6], 64, 64, 4
    $region9: #{tpu_custom_call.1} parent=1 // pred_fallthru
      _
    // Predicated region
    $region10: #{tpu_custom_call.1} parent=1 // pred_check
      _
    $region11: #{tpu_custom_call.1} parent=1 // pred_check_branch
      %40 = sbr.rel (0) target = $region13
    $region12: #{tpu_custom_call.1} parent=1 // pred_region
      %s42 = ssub.s32 128, 128
      %43 = vsyncadd [#allocation6], %s42
      %s44 = sshll.u32 [#allocation7], 4
      %s45 = int_to_ptr.vmem [resolvable:$true] %s44
      %50 = dma.hbm_to_vmem [thread:$0]  %s2, 128, %s45, [#allocation6], 64, 64, 4
    $region13: #{tpu_custom_call.1} parent=1 // pred_fallthru
      _
    // Predicated region
    $region14: #{tpu_custom_call.1} parent=1 // pred_check
      _
    $region15: #{tpu_custom_call.1} parent=1 // pred_check_branch
      %52 = sbr.rel (0) target = $region17
    $region16: #{tpu_custom_call.1} parent=1 // pred_region
      %s54 = ssub.s32 1024, 1024
      %55 = vsyncadd [#allocation9], %s54
      %s56 = sshll.u32 [#allocation8], 4
      %s57 = int_to_ptr.vmem [resolvable:$true] %s56
      %62 = dma.hbm_to_vmem [thread:$0]  %s3, 1024, %s57, [#allocation9], 64, 64, 4
    $region17: #{tpu_custom_call.1} parent=1 // pred_fallthru
      _
    // Predicated region
    $region18: #{tpu_custom_call.1} parent=1 // pred_check
      _
    $region19: #{tpu_custom_call.1} parent=1 // pred_check_branch
      %64 = sbr.rel (0) target = $region21
    $region20: #{tpu_custom_call.1} parent=1 // pred_region
      %s66 = ssub.s32 1024, 1024
      %67 = vsyncadd [#allocation9], %s66
      %s68 = sshll.u32 [#allocation10], 4
      %s69 = int_to_ptr.vmem [resolvable:$true] %s68
      %74 = dma.hbm_to_vmem [thread:$0]  %s4, 1024, %s69, [#allocation9], 64, 64, 4
    $region21: #{tpu_custom_call.1} parent=1 // pred_fallthru
      _
    // Predicated region
    $region22: #{tpu_custom_call.1} parent=1 // pred_check
      _
    $region23: #{tpu_custom_call.1} parent=1 // pred_check_branch
      %76 = sbr.rel (0) target = $region25
    $region24: #{tpu_custom_call.1} parent=1 // pred_region
      _
    $region25: #{tpu_custom_call.1} parent=1 // pred_fallthru
      _
    // Predicated region
    $region26: #{tpu_custom_call.1} parent=1 // pred_check
      _
    $region27: #{tpu_custom_call.1} parent=1 // pred_check_branch
      %78 = sbr.rel (0) target = $region29
    $region28: #{tpu_custom_call.1} parent=1 // pred_region
      %79 = dma.done [#allocation3], 128
    $region29: #{tpu_custom_call.1} parent=1 // pred_fallthru
      _
    // Predicated region
    $region30: #{tpu_custom_call.1} parent=1 // pred_check
      _
    $region31: #{tpu_custom_call.1} parent=1 // pred_check_branch
      %81 = sbr.rel (0) target = $region33
    $region32: #{tpu_custom_call.1} parent=1 // pred_region
      %82 = dma.done [#allocation6], 128
    $region33: #{tpu_custom_call.1} parent=1 // pred_fallthru
      _
    // Predicated region
    $region34: #{tpu_custom_call.1} parent=1 // pred_check
      _
    $region35: #{tpu_custom_call.1} parent=1 // pred_check_branch
      %84 = sbr.rel (0) target = $region37
    $region36: #{tpu_custom_call.1} parent=1 // pred_region
      %85 = dma.done [#allocation6], 128
    $region37: #{tpu_custom_call.1} parent=1 // pred_fallthru
      _
    // Predicated region
    $region38: #{tpu_custom_call.1} parent=1 // pred_check
      _
    $region39: #{tpu_custom_call.1} parent=1 // pred_check_branch
      %87 = sbr.rel (0) target = $region41
    $region40: #{tpu_custom_call.1} parent=1 // pred_region
      %88 = dma.done [#allocation9], 1024
    $region41: #{tpu_custom_call.1} parent=1 // pred_fallthru
      _
    // Predicated region
    $region42: #{tpu_custom_call.1} parent=1 // pred_check
      _
    $region43: #{tpu_custom_call.1} parent=1 // pred_check_branch
      %90 = sbr.rel (0) target = $region45
    $region44: #{tpu_custom_call.1} parent=1 // pred_region
      %91 = dma.done [#allocation9], 1024
    $region45: #{tpu_custom_call.1} parent=1 // pred_fallthru
      _
    %v93 = vld [vmem:[#allocation2] sm:$0xf]
    %v94 = vld [vmem:[#allocation2 + $0x4] sm:$0xf]
    %v95 = vld [vmem:[#allocation5] sm:$0xf]
    %v96 = vld [vmem:[#allocation5 + $0x4] sm:$0xf]
    %v99 = vunpack.c.l.b16 %v93
    %v100 = vunpack.c.l.b16 %v94
    %v101 = vpack.c.b16 %v100, %v99
    %v104 = vunpack.c.l.b16 %v95
    %v105 = vunpack.c.l.b16 %v96
    %v106 = vpack.c.b16 %v105, %v104
    %vm108 = vcmask 130048
    %v110 = vsel %vm108, %v101, 0
    %112 = vmatprep.subr.bf16.mxu0 0
    %113 = vmatpush1.bf16.msra.mxu0 0
    %114 = vmatprep.subr.bf16.mxu0 0
    %115 = vmatpush1.bf16.msra.mxu0 0
    %116 = vmatprep.subr.bf16.mxu0 0
    %117 = vmatpush1.bf16.msra.mxu0 0
    %118 = vmatprep.subr.bf16.mxu0 0
    %119 = vmatpush1.bf16.msra.mxu0 0
    %120 = vmatprep.subr.bf16.mxu0 0
    %121 = vmatpush1.bf16.msra.mxu0 0
    %122 = vmatprep.subr.bf16.mxu0 0
    %123 = vmatpush1.bf16.msra.mxu0 0
    %124 = vmatprep.subr.bf16.mxu0 0
    %125 = vmatpush1.bf16.msra.mxu0 0
    %126 = vmatprep.subr.bf16.mxu0 0
    %127 = vmatpush1.bf16.msra.mxu0 %v106
    %128 = vmatprep.subr.bf16.mxu0 0
    %129 = vmatpush2.bf16.msra.mxu0 0
    %130 = vmatprep.subr.bf16.mxu0 0
    %131 = vmatpush2.bf16.msra.mxu0 0
    %132 = vmatprep.subr.bf16.mxu0 0
    %133 = vmatpush2.bf16.msra.mxu0 0
    %134 = vmatprep.subr.bf16.mxu0 0
    %135 = vmatpush2.bf16.msra.mxu0 0
    %136 = vmatprep.subr.bf16.mxu0 0
    %137 = vmatpush2.bf16.msra.mxu0 0
    %138 = vmatprep.subr.bf16.mxu0 0
    %139 = vmatpush2.bf16.msra.mxu0 0
    %140 = vmatprep.subr.bf16.mxu0 0
    %141 = vmatpush2.bf16.msra.mxu0 0
    %142 = vmatprep.subr.bf16.mxu0 0
    %143 = vmatpush2.bf16.msra.mxu0 0
    %144 = vmatprep.mubr.bf16.mxu0 0
    %145 = vmatmul.mubr.bf16.gmra.mxu0 %v110
    %v146 = vpop.f32.mrf.mxu0
    %v147 = vadd.f32 0.0, %v146
    %v148 = vpop.f32.mrf.mxu0
    %v149 = vpop.f32.mrf.mxu0
    %v150 = vadd.f32 0.0, %v149
    %v151 = vpop.f32.mrf.mxu0
    %152 = vdwg.mxu0
    %v153 = vpack.c.bf16 %v150, %v147
    %v154 = vld [vmem:[#allocation8] sm:$0xf]
    %v155 = vld [vmem:[#allocation8 + $0x4] sm:$0xf]
    %v156 = vld [vmem:[#allocation8 + $0x8] sm:$0xf]
    %v157 = vld [vmem:[#allocation8 + $0xc] sm:$0xf]
    %v158 = vld [vmem:[#allocation8 + $0x10] sm:$0xf]
    %v159 = vld [vmem:[#allocation8 + $0x14] sm:$0xf]
    %v160 = vld [vmem:[#allocation8 + $0x18] sm:$0xf]
    %v161 = vld [vmem:[#allocation8 + $0x1c] sm:$0xf]
    %v162 = vld [vmem:[#allocation8 + $0x20] sm:$0xf]
    %v163 = vld [vmem:[#allocation8 + $0x24] sm:$0xf]
    %v164 = vld [vmem:[#allocation8 + $0x28] sm:$0xf]
    %v165 = vld [vmem:[#allocation8 + $0x2c] sm:$0xf]
    %v166 = vld [vmem:[#allocation8 + $0x30] sm:$0xf]
    %v167 = vld [vmem:[#allocation8 + $0x34] sm:$0xf]
    %v168 = vld [vmem:[#allocation8 + $0x38] sm:$0xf]
    %v169 = vld [vmem:[#allocation8 + $0x3c] sm:$0xf]
    %v170 = vld [vmem:[#allocation7] sm:$0xf]
    %v171 = vld [vmem:[#allocation7 + $0x4] sm:$0xf]
    %v172 = vld [vmem:[#allocation10] sm:$0xf]
    %v173 = vld [vmem:[#allocation10 + $0x4] sm:$0xf]
    %v174 = vld [vmem:[#allocation10 + $0x8] sm:$0xf]
    %v175 = vld [vmem:[#allocation10 + $0xc] sm:$0xf]
    %v176 = vld [vmem:[#allocation10 + $0x10] sm:$0xf]
    %v177 = vld [vmem:[#allocation10 + $0x14] sm:$0xf]
    %v178 = vld [vmem:[#allocation10 + $0x18] sm:$0xf]
    %v179 = vld [vmem:[#allocation10 + $0x1c] sm:$0xf]
    %v180 = vld [vmem:[#allocation10 + $0x20] sm:$0xf]
    %v181 = vld [vmem:[#allocation10 + $0x24] sm:$0xf]
    %v182 = vld [vmem:[#allocation10 + $0x28] sm:$0xf]
    %v183 = vld [vmem:[#allocation10 + $0x2c] sm:$0xf]
    %v184 = vld [vmem:[#allocation10 + $0x30] sm:$0xf]
    %v185 = vld [vmem:[#allocation10 + $0x34] sm:$0xf]
    %v186 = vld [vmem:[#allocation10 + $0x38] sm:$0xf]
    %v187 = vld [vmem:[#allocation10 + $0x3c] sm:$0xf]
    %v190 = vunpack.c.l.b16 %v170
    %v191 = vunpack.c.l.b16 %v171
    %v192 = vpack.c.b16 %v191, %v190
    %v210 = vunpack.c.l.b16 %v172
    %v211 = vunpack.c.l.b16 %v173
    %v212 = vunpack.c.l.b16 %v174
    %v213 = vunpack.c.l.b16 %v175
    %v214 = vunpack.c.l.b16 %v176
    %v215 = vunpack.c.l.b16 %v177
    %v216 = vunpack.c.l.b16 %v178
    %v217 = vunpack.c.l.b16 %v179
    %v218 = vunpack.c.l.b16 %v180
    %v219 = vunpack.c.l.b16 %v181
    %v220 = vunpack.c.l.b16 %v182
    %v221 = vunpack.c.l.b16 %v183
    %v222 = vunpack.c.l.b16 %v184
    %v223 = vunpack.c.l.b16 %v185
    %v224 = vunpack.c.l.b16 %v186
    %v225 = vunpack.c.l.b16 %v187
    %v226 = vpack.c.b16 %v211, %v210
    %v227 = vpack.c.b16 %v213, %v212
    %v228 = vpack.c.b16 %v215, %v214
    %v229 = vpack.c.b16 %v217, %v216
    %v230 = vpack.c.b16 %v219, %v218
    %v231 = vpack.c.b16 %v221, %v220
    %v232 = vpack.c.b16 %v223, %v222
    %v233 = vpack.c.b16 %v225, %v224
    %242 = vmatprep.subr.bf16.mxu0 0
    %243 = vmatpush1.bf16.msra.mxu0 %v233
    %244 = vmatprep.subr.bf16.mxu0 0
    %245 = vmatpush1.bf16.msra.mxu0 %v232
    %246 = vmatprep.subr.bf16.mxu0 0
    %247 = vmatpush1.bf16.msra.mxu0 %v231
    %248 = vmatprep.subr.bf16.mxu0 0
    %249 = vmatpush1.bf16.msra.mxu0 %v230
    %250 = vmatprep.subr.bf16.mxu0 0
    %251 = vmatpush1.bf16.msra.mxu0 %v229
    %252 = vmatprep.subr.bf16.mxu0 0
    %253 = vmatpush1.bf16.msra.mxu0 %v228
    %254 = vmatprep.subr.bf16.mxu0 0
    %255 = vmatpush1.bf16.msra.mxu0 %v227
    %256 = vmatprep.subr.bf16.mxu0 0
    %257 = vmatpush1.bf16.msra.mxu0 %v226
    %258 = vmatprep.subr.bf16.mxu0 0
    %259 = vmatpush2.bf16.msra.mxu0 0
    %260 = vmatprep.subr.bf16.mxu0 0
    %261 = vmatpush2.bf16.msra.mxu0 0
    %262 = vmatprep.subr.bf16.mxu0 0
    %263 = vmatpush2.bf16.msra.mxu0 0
    %264 = vmatprep.subr.bf16.mxu0 0
    %265 = vmatpush2.bf16.msra.mxu0 0
    %266 = vmatprep.subr.bf16.mxu0 0
    %267 = vmatpush2.bf16.msra.mxu0 0
    %268 = vmatprep.subr.bf16.mxu0 0
    %269 = vmatpush2.bf16.msra.mxu0 0
    %270 = vmatprep.subr.bf16.mxu0 0
    %271 = vmatpush2.bf16.msra.mxu0 0
    %272 = vmatprep.subr.bf16.mxu0 0
    %273 = vmatpush2.bf16.msra.mxu0 0
    %274 = vmatprep.mubr.bf16.mxu0 0
    %275 = vmatmul.mubr.bf16.gmra.mxu0 %v192
    %v276 = vpop.f32.mrf.mxu0
    %v277 = vadd.f32 0.0, %v276
    %v278 = vpop.f32.mrf.mxu0
    %v279 = vpop.f32.mrf.mxu0
    %v280 = vadd.f32 0.0, %v279
    %v281 = vpop.f32.mrf.mxu0
    %282 = vdwg.mxu0
    %v299 = vunpack.c.l.b16 %v154
    %v300 = vunpack.c.l.b16 %v155
    %v301 = vunpack.c.l.b16 %v156
    %v302 = vunpack.c.l.b16 %v157
    %v303 = vunpack.c.l.b16 %v158
    %v304 = vunpack.c.l.b16 %v159
    %v305 = vunpack.c.l.b16 %v160
    %v306 = vunpack.c.l.b16 %v161
    %v307 = vunpack.c.l.b16 %v162
    %v308 = vunpack.c.l.b16 %v163
    %v309 = vunpack.c.l.b16 %v164
    %v310 = vunpack.c.l.b16 %v165
    %v311 = vunpack.c.l.b16 %v166
    %v312 = vunpack.c.l.b16 %v167
    %v313 = vunpack.c.l.b16 %v168
    %v314 = vunpack.c.l.b16 %v169
    %v315 = vpack.c.b16 %v300, %v299
    %v316 = vpack.c.b16 %v302, %v301
    %v317 = vpack.c.b16 %v304, %v303
    %v318 = vpack.c.b16 %v306, %v305
    %v319 = vpack.c.b16 %v308, %v307
    %v320 = vpack.c.b16 %v310, %v309
    %v321 = vpack.c.b16 %v312, %v311
    %v322 = vpack.c.b16 %v314, %v313
    %331 = vmatprep.subr.bf16.mxu0 0
    %332 = vmatpush1.bf16.msra.mxu0 %v322
    %333 = vmatprep.subr.bf16.mxu0 0
    %334 = vmatpush1.bf16.msra.mxu0 %v321
    %335 = vmatprep.subr.bf16.mxu0 0
    %336 = vmatpush1.bf16.msra.mxu0 %v320
    %337 = vmatprep.subr.bf16.mxu0 0
    %338 = vmatpush1.bf16.msra.mxu0 %v319
    %339 = vmatprep.subr.bf16.mxu0 0
    %340 = vmatpush1.bf16.msra.mxu0 %v318
    %341 = vmatprep.subr.bf16.mxu0 0
    %342 = vmatpush1.bf16.msra.mxu0 %v317
    %343 = vmatprep.subr.bf16.mxu0 0
    %344 = vmatpush1.bf16.msra.mxu0 %v316
    %345 = vmatprep.subr.bf16.mxu0 0
    %346 = vmatpush1.bf16.msra.mxu0 %v315
    %347 = vmatprep.subr.bf16.mxu0 0
    %348 = vmatpush2.bf16.msra.mxu0 0
    %349 = vmatprep.subr.bf16.mxu0 0
    %350 = vmatpush2.bf16.msra.mxu0 0
    %351 = vmatprep.subr.bf16.mxu0 0
    %352 = vmatpush2.bf16.msra.mxu0 0
    %353 = vmatprep.subr.bf16.mxu0 0
    %354 = vmatpush2.bf16.msra.mxu0 0
    %355 = vmatprep.subr.bf16.mxu0 0
    %356 = vmatpush2.bf16.msra.mxu0 0
    %357 = vmatprep.subr.bf16.mxu0 0
    %358 = vmatpush2.bf16.msra.mxu0 0
    %359 = vmatprep.subr.bf16.mxu0 0
    %360 = vmatpush2.bf16.msra.mxu0 0
    %361 = vmatprep.subr.bf16.mxu0 0
    %362 = vmatpush2.bf16.msra.mxu0 0
    %363 = vmatprep.mubr.bf16.mxu0 0
    %364 = vmatmul.mubr.bf16.gmra.mxu0 %v153
    %v365 = vpop.f32.mrf.mxu0
    %v366 = vadd.f32 %v277, %v365
    %v367 = vpop.f32.mrf.mxu0
    %v368 = vpop.f32.mrf.mxu0
    %v369 = vadd.f32 %v280, %v368
    %v370 = vpop.f32.mrf.mxu0
    %371 = vdwg.mxu0
    %v372 = vld [vmem:[%s5] sm:$0x1]
    %v374 = vlaneseq
    %v375 = vshrl.u32 %v374, 7
    %v376 = vsub.s32 0, %v375
    %v377 = vrot.slane %v372, %v376
    %v379 = vadd.f32 %v366, %v377
    %v380 = vadd.f32 %v369, %v377
    %v381 = vmax.f32 %v379, 0.0
    %v382 = vmax.f32 %v380, 0.0
    %v383 = vpack.c.bf16 %v382, %v381
    %v385 = vunpack.c.l.b16 %v383
    %v386 = vunpack.c.h.b16 %v383
    %v387 = vpack.c.b16 %v385, %v385
    %v388 = vpack.c.b16 %v386, %v386
    %391 = vst [vmem:[#allocation11] sm:$0xf] %v387
    %392 = vst [vmem:[#allocation11 + $0x4] sm:$0xf] %v388
    // Predicated region
    $region46: #{tpu_custom_call.1} parent=1 // pred_check
      _
    $region47: #{tpu_custom_call.1} parent=1 // pred_check_branch
      %394 = sbr.rel (0) target = $region49
    $region48: #{tpu_custom_call.1} parent=1 // pred_region
      %s396 = ssub.s32 128, 128
      %397 = vsyncadd [#allocation4], %s396
      %s398 = sshll.u32 [#allocation11], 4
      %s399 = int_to_ptr.vmem [resolvable:$true] %s398
      %404 = dma.vmem_to_hbm [thread:$0]  %s399, 128, %s6, [#allocation4], 64, 64, 4
    $region49: #{tpu_custom_call.1} parent=1 // pred_fallthru
      _
    // Predicated region
    $region50: #{tpu_custom_call.1} parent=1 // pred_check
      _
    $region51: #{tpu_custom_call.1} parent=1 // pred_check_branch
      %406 = sbr.rel (0) target = $region53
    $region52: #{tpu_custom_call.1} parent=1 // pred_region
      %407 = dma.done [#allocation4], 128
    $region53: #{tpu_custom_call.1} parent=1 // pred_fallthru
      _
    %408 = vsyncpa [#allocation3], 1
    %409 = vsyncpa [#allocation6], 1
    %410 = vsyncpa [#allocation9], 1
    %411 = vsyncpa [#allocation4], 1

</llo_original>
